<compile_context>
chip_gen: v5e
topology: v5e:2x2
jax: 0.10.0
libtpu: 0.0.40
codegen_flags: <defaults>
</compile_context>

<pallas_src>
import functools
import math

import jax
import jax.numpy as jnp
from jax.experimental import pallas as pl
from jax.experimental.pallas import tpu as pltpu

_MiB = 1024 * 1024


def _cdiv(a, b):
    return -(-a // b)


def _round_up(a, b):
    return _cdiv(a, b) * b


def _tile_dim(size, max_tile, align):
    """(padded_extent, tile) with align | tile <= max_tile and tile | padded_extent.

    Searches a small window of tile counts to minimise padding waste.
    """
    padded = _round_up(size, align)
    if padded <= max_tile:
        return padded, padded
    n0 = _cdiv(padded, max_tile)
    best_ext, best_tile = None, None
    for n_tiles in range(n0, n0 + 8):
        tile = _round_up(_cdiv(padded, n_tiles), align)
        ext = n_tiles * tile
        if best_ext is None or ext < best_ext:
            best_ext, best_tile = ext, tile
    return best_ext, best_tile


def _tpu_device_kind():
    try:
        return jax.devices()[0].device_kind.lower()
    except Exception:
        return ""


def _vmem_cap_bytes(kind):
    # v7x: 64 MiB VMEM per TensorCore; v4/v5e/v5p/v6e: 128 MiB.  Unknown chips
    # get the conservative cap.
    if any(v in kind for v in ("v4", "v5", "v6")) and "v7" not in kind:
        return 100 * _MiB
    return 56 * _MiB


# --------------------------------------------------------------------------
# Kernels
# --------------------------------------------------------------------------
def _fc_kernel_single_k(x_ref, w_ref, b_ref, o_ref, *, apply_relu):
    """Whole K reduction in one MXU pass; bias + ReLU fused in the epilogue."""
    out = jnp.dot(x_ref[...], w_ref[...], preferred_element_type=jnp.float32)
    out = out + b_ref[...]
    if apply_relu:
        out = jnp.maximum(out, 0.0)
    o_ref[...] = out.astype(o_ref.dtype)


def _fc_kernel_tiled_k(x_ref, w_ref, b_ref, o_ref, *scratch,
                       apply_relu, x_resident, acc_in_out):
    """grid = (M tiles, N tiles, K tiles); K (reduction) is last / arbitrary."""
    k = pl.program_id(2)
    # f32 outputs accumulate straight into the (k-invariant) output block.
    acc_ref = o_ref if acc_in_out else scratch[0]

    # x_ref is (kt, tm, tk) when resident (pick the k-th slab), else (tm, tk).
    x_blk = x_ref[k] if x_resident else x_ref[...]
    prod = jnp.dot(x_blk, w_ref[...], preferred_element_type=jnp.float32)

    @pl.when(k == 0)
    def _():
        acc_ref[...] = prod                       # direct write, no zero-init

    @pl.when(k > 0)
    def _():
        acc_ref[...] = acc_ref[...] + prod

    @pl.when(k == pl.num_programs(2) - 1)
    def _():
        out = acc_ref[...] + b_ref[...]           # bias already f32
        if apply_relu:
            out = jnp.maximum(out, 0.0)
        o_ref[...] = out.astype(o_ref.dtype)


# --------------------------------------------------------------------------
# Wrapper
# --------------------------------------------------------------------------
def fc_forward(x, w_pad, b_pad, *, n_out, relu, tn, tk,
               compute_dtype=jnp.bfloat16, out_dtype=None, max_tm=512,
               vmem_cap=56 * _MiB, is_v7=False):
    """y = [relu](x @ w + b).

    x: (..., K).  w_pad: pre-cast / pre-padded (Kp, Np) transposed weight.
    b_pad: pre-padded (1, Np) f32 bias.  Designed to run under jax.jit.
    """
    orig_shape = x.shape
    K = orig_shape[-1]
    x2 = x.reshape(-1, K)
    M = x2.shape[0]
    Kp, Np = w_pad.shape
    out_dtype = out_dtype or x.dtype
    itemsize = jnp.dtype(compute_dtype).itemsize
    out_itemsize = jnp.dtype(out_dtype).itemsize
    m_align = 16 if itemsize == 2 else 8          # bf16 sublane packing

    Mp, tm = _tile_dim(M, max_tm, m_align)

    # v7x only: if there is a single (i, j) tile, split N so both TensorCores
    # get one of the two "parallel" tiles.  On 1-TC parts this is pure loss.
    if is_v7 and (Mp // tm) * (Np // tn) == 1 and Np % 256 == 0:
        tn = Np // 2

    mt, nt, kt = Mp // tm, Np // tn, Kp // tk
    single_k = kt == 1

    # Cast x to the MXU dtype and zero-pad ragged edges (zeros are harmless
    # for the contraction; padded rows/cols are sliced off below).
    x_c = x2.astype(compute_dtype)
    if (Mp, Kp) != (M, K):
        x_c = jnp.pad(x_c, ((0, Mp - M), (0, Kp - K)))

    # Keep x's whole K extent VMEM-resident when cheap: the weight is then
    # streamed exactly mt times and x exactly once.
    x_resident = single_k or (2 * tm * Kp * itemsize <= 16 * _MiB)
    acc_in_out = out_itemsize == 4

    # VMEM budget derived from the actual tiles (double-buffered streams).
    vmem_est = (2 * tm * (Kp if x_resident else tk) * itemsize      # x
                + 2 * tk * tn * itemsize                            # weight
                + 2 * tm * tn * out_itemsize                        # out
                + 2 * tn * 4                                        # bias
                + (0 if (single_k or acc_in_out) else tm * tn * 4)) # acc
    vmem_limit = int(min(max(2 * vmem_est, 32 * _MiB), vmem_cap))

    x_bytes = Mp * Kp * itemsize
    w_bytes = Kp * Np * itemsize
    flops = 2 * Mp * Np * Kp

    if single_k:
        # Loop order: keep the operand that would otherwise be re-streamed
        # more resident across the inner grid axis.
        m_outer = (x_bytes + mt * w_bytes) <= (w_bytes + nt * x_bytes)
        if m_outer:
            grid = (mt, nt)
            x_map, w_map = (lambda i, j: (i, 0)), (lambda i, j: (0, j))
            b_map, o_map = (lambda i, j: (0, j)), (lambda i, j: (i, j))
            streamed = x_bytes + mt * w_bytes
        else:
            grid = (nt, mt)
            x_map, w_map = (lambda j, i: (i, 0)), (lambda j, i: (0, j))
            b_map, o_map = (lambda j, i: (0, j)), (lambda j, i: (i, j))
            streamed = w_bytes + nt * x_bytes
        kernel = functools.partial(_fc_kernel_single_k, apply_relu=relu)
        in_specs = [pl.BlockSpec((tm, Kp), x_map),       # x, fully K-resident
                    pl.BlockSpec((Kp, tn), w_map),       # weight tile
                    pl.BlockSpec((1, tn), b_map)]        # bias
        out_spec = pl.BlockSpec((tm, tn), o_map)
        scratch_shapes = []
        dims = ("parallel", "parallel")
        x_arg = x_c
    else:
        grid = (mt, nt, kt)
        if x_resident:
            # (kt, Mp, tk) layout: the kernel picks slab k with a cheap
            # leading-axis dynamic index; the block index ignores j and k so
            # x is DMA'd exactly once per row tile.
            x_arg = x_c.reshape(Mp, kt, tk).transpose(1, 0, 2)
            x_spec = pl.BlockSpec((kt, tm, tk), lambda i, j, k: (0, i, 0))
            streamed = x_bytes + mt * w_bytes
        else:
            x_arg = x_c
            x_spec = pl.BlockSpec((tm, tk), lambda i, j, k: (i, k))
            streamed = nt * x_bytes + mt * w_bytes
        in_specs = [x_spec,
                    pl.BlockSpec((tk, tn), lambda i, j, k: (k, j)),
                    pl.BlockSpec((1, tn), lambda i, j, k: (0, j))]
        out_spec = pl.BlockSpec((tm, tn), lambda i, j, k: (i, j))
        scratch_shapes = ([] if acc_in_out
                          else [pltpu.VMEM((tm, tn), jnp.float32)])
        kernel = functools.partial(_fc_kernel_tiled_k, apply_relu=relu,
                                   x_resident=x_resident,
                                   acc_in_out=acc_in_out)
        dims = ("parallel", "parallel", "arbitrary")

    bytes_accessed = streamed + Np * 4 + Mp * Np * out_itemsize

    y = pl.pallas_call(
        kernel,
        out_shape=jax.ShapeDtypeStruct((Mp, Np), out_dtype),
        grid_spec=pltpu.PrefetchScalarGridSpec(
            num_scalar_prefetch=0,
            grid=grid,
            in_specs=in_specs,
            out_specs=out_spec,
            scratch_shapes=scratch_shapes),
        compiler_params=pltpu.CompilerParams(
            dimension_semantics=dims,
            vmem_limit_bytes=vmem_limit),
        cost_estimate=pl.CostEstimate(flops=int(flops), transcendentals=0,
                                      bytes_accessed=int(bytes_accessed)),
    )(x_arg, w_pad, b_pad)

    if (Mp, Np) != (M, n_out):
        y = y[:M, :n_out]
    return y.reshape(orig_shape[:-1] + (n_out,))


# --------------------------------------------------------------------------
# Module
# --------------------------------------------------------------------------
class FC:
    """JAX/Pallas port of faster_rcnn.network.FC (nn.Linear [+ ReLU])."""

    def __init__(self, in_features, out_features, relu=True, key=None,
                 compute_dtype=jnp.bfloat16, max_tn=1024, max_tk=1024):
        if key is None:
            key = jax.random.PRNGKey(0)
        kw, kb = jax.random.split(key)
        # nn.Linear default init: U(-1/sqrt(in), 1/sqrt(in)).
        bound = 1.0 / math.sqrt(in_features)
        # PyTorch stores (out_features, in_features); keep the transpose
        # (in_features, out_features) so the kernel reads it lane-contiguous.
        self.w_t = jax.random.uniform(
            kw, (in_features, out_features), jnp.float32, -bound, bound)
        self.b = jax.random.uniform(
            kb, (out_features,), jnp.float32, -bound, bound)
        self.relu = relu
        self.in_features = in_features
        self.out_features = out_features

        kind = _tpu_device_kind()
        is_v7 = ("v7" in kind) or ("7x" in kind)
        vmem_cap = _vmem_cap_bytes(kind)

        Kp, tk = _tile_dim(in_features, max_tk, 128)
        Np, tn = _tile_dim(out_features, max_tn, 128)

        # Pre-cast + pre-pad weight and bias ONCE.  The weight is the dominant
        # HBM stream at small batch; padding it on every call would add a full
        # read+write of it before the kernel even starts.
        w_c = self.w_t.astype(compute_dtype)
        if (Kp, Np) != (in_features, out_features):
            w_c = jnp.pad(w_c, ((0, Kp - in_features), (0, Np - out_features)))
        b_f32 = self.b.astype(jnp.float32)
        if Np != out_features:
            b_f32 = jnp.pad(b_f32, (0, Np - out_features))
        self.w_pad = jax.device_put(w_c)
        self.b_pad = jax.device_put(b_f32.reshape(1, Np))

        # TODO(synk): add int8 (v5e/v6e) / fp8-e4m3 (v7x) weight paths with
        # per-output-channel scales folded into the epilogue.

        # Jit the full forward so x cast/pad/slice fuse around the pallas_call
        # and per-call dispatch overhead disappears (retraces only per batch).
        self._forward = jax.jit(functools.partial(
            fc_forward, n_out=out_features, relu=relu, tn=tn, tk=tk,
            compute_dtype=compute_dtype, vmem_cap=vmem_cap, is_v7=is_v7))

    def __call__(self, x):
        return self._forward(x, self.w_pad, self.b_pad)


if __name__ == "__main__":
    key = jax.random.PRNGKey(0)
    k_x1, k_p1, k_x2, k_p2 = jax.random.split(key, 4)

    def _reference(x, fc):
        # Same bf16-operand / f32-accumulate contraction in plain JAX.
        y = jnp.dot(x.astype(jnp.bfloat16), fc.w_t.astype(jnp.bfloat16),
                    preferred_element_type=jnp.float32) + fc.b
        return jnp.maximum(y, 0.0) if fc.relu else y

    # 1) Small FC: exercises the single-K (fully VMEM-resident) fast path.
    batch, in_features, out_features = 8, 128, 256
    x1 = jax.random.normal(k_x1, (batch, in_features), jnp.float32)
    fc1 = FC(in_features, out_features, relu=True, key=k_p1)
    y1 = jax.block_until_ready(fc1(x1))
    assert y1.shape == (batch, out_features)
    assert jnp.allclose(y1, _reference(x1, fc1), atol=2e-2, rtol=2e-2), \
        "single-K path mismatch vs reference"

    # 2) Larger-K FC: exercises the tiled-K accumulator path (K > max_tk).
    batch2, in2, out2 = 8, 2304, 256
    x2 = jax.random.normal(k_x2, (batch2, in2), jnp.float32)
    fc2 = FC(in2, out2, relu=False, key=k_p2)
    y2 = jax.block_until_ready(fc2(x2))
    assert y2.shape == (batch2, out2)
    assert jnp.allclose(y2, _reference(x2, fc2), atol=2e-2, rtol=2e-2), \
        "tiled-K path mismatch vs reference"

    print("KERNEL_OK")
</pallas_src>

<mosaic_0001>
module attributes {stable_mosaic.version = 11 : i64} {
  func.func @_fc_kernel_single_k(%arg0: i32, %arg1: i32, %arg2: memref<16x128xbf16, #tpu.memory_space<vmem>>, %arg3: memref<128x256xbf16, #tpu.memory_space<vmem>>, %arg4: memref<1x256xf32, #tpu.memory_space<vmem>>, %arg5: memref<16x256xf32, #tpu.memory_space<vmem>>) attributes {dimension_semantics = [#tpu.dimension_semantics<parallel>, #tpu.dimension_semantics<parallel>], iteration_bounds = array<i64: 1, 1>, scalar_prefetch = 0 : i64, scratch_operands = 0 : i64, tpu.core_type = #tpu.core_type<tc>, window_params = [{transform_indices = @transform_0, window_bounds = array<i64: 16, 128>}, {transform_indices = @transform_1, window_bounds = array<i64: 128, 256>}, {transform_indices = @transform_2, window_bounds = array<i64: 1, 256>}, {transform_indices = @transform_3, window_bounds = array<i64: 16, 256>}]} {
    %c0 = arith.constant 0 : index
    %c0_0 = arith.constant 0 : index
    %0 = vector.load %arg2[%c0, %c0_0] : memref<16x128xbf16, #tpu.memory_space<vmem>>, vector<16x128xbf16>
    %c0_1 = arith.constant 0 : index
    %c0_2 = arith.constant 0 : index
    %1 = vector.load %arg3[%c0_1, %c0_2] : memref<128x256xbf16, #tpu.memory_space<vmem>>, vector<128x256xbf16>
    %cst = arith.constant dense<0.000000e+00> : vector<16x256xf32>
    %2 = tpu.matmul %0, %1, %cst {dimension_numbers = #tpu.dot_dimension_numbers<[1], [0], [0], [1], [0, 0, 1, 1], [], []>} : vector<16x128xbf16>, vector<128x256xbf16>, vector<16x256xf32> -> vector<16x256xf32>
    %c0_3 = arith.constant 0 : index
    %c0_4 = arith.constant 0 : index
    %3 = vector.load %arg4[%c0_3, %c0_4] : memref<1x256xf32, #tpu.memory_space<vmem>>, vector<1x256xf32>
    %4 = vector.broadcast %3 : vector<1x256xf32> to vector<16x256xf32>
    %5 = arith.addf %2, %4 : vector<16x256xf32>
    %cst_5 = arith.constant 0.000000e+00 : f32
    %6 = vector.broadcast %cst_5 : f32 to vector<16x256xf32>
    %7 = arith.maximumf %5, %6 : vector<16x256xf32>
    %c0_6 = arith.constant 0 : index
    %c0_7 = arith.constant 0 : index
    %8 = vector.load %arg5[%c0_6, %c0_7] : memref<16x256xf32, #tpu.memory_space<vmem>>, vector<16x256xf32>
    tpu.vector_store %arg5[%c0_6, %c0_7], %7 {strides = array<i32>} : memref<16x256xf32, #tpu.memory_space<vmem>>, vector<16x256xf32>,
    return
  }
  func.func @transform_0(%arg0: i32, %arg1: i32) -> (i32, i32) {
    %c0_i32 = arith.constant 0 : i32
    %c0_i32_0 = arith.constant 0 : i32
    return %arg0, %c0_i32 : i32, i32
  }
  func.func @transform_1(%arg0: i32, %arg1: i32) -> (i32, i32) {
    %c0_i32 = arith.constant 0 : i32
    %c0_i32_0 = arith.constant 0 : i32
    return %c0_i32, %arg1 : i32, i32
  }
  func.func @transform_2(%arg0: i32, %arg1: i32) -> (i32, i32) {
    %c0_i32 = arith.constant 0 : i32
    %c0_i32_0 = arith.constant 0 : i32
    return %c0_i32, %arg1 : i32, i32
  }
  func.func @transform_3(%arg0: i32, %arg1: i32) -> (i32, i32) {
    %c0_i32 = arith.constant 0 : i32
    return %arg0, %arg1 : i32, i32
  }
}

</mosaic_0001>

<llo_original>
// kernel: fc_forward.1
$region0: #{fc_forward.1}
  #allocation0 [shape = 'u32[]', space=smem, size = 0x4, offset = 0x4, fixed_abs, tag = 'smem constant byte address 0x4 - core index']
  #allocation1 [shape = 'u32[72,128]{1,0:T(1,128)}', space=vmem, size = 0x9000, scoped, tag = 'internal scratch']
  %s0 = inlined_call_operand.vmem [shape: bf16[16,128], index: 0, kind: input, shape index: {}]
  %s1 = inlined_call_operand.hbm [shape: bf16[128,256], index: 1, kind: input, shape index: {}]
  %s2 = inlined_call_operand.vmem [shape: f32[1,256], index: 2, kind: input, shape index: {}]
  %s3 = inlined_call_operand.vmem [shape: f32[16,256], index: 3, kind: output, shape index: {}]
  %s4 = sld [smem:[#allocation0]]
  $region26: #{fc_forward.1} parent=0
    _
  %s6 = ssub.s32 1, %s4
  %s7 = scalar_select 0, %s6, %s4
  $region1: #{fc_forward.1} parent=0
    #allocation2 [shape = 'u8[65536]{0}', space=vmem, size = 0x10000, scoped, tag = 'input window, operand 1, single buffered']
    #allocation3 [shape = 's32[1]{0}', space=sflag, size = 0x4, scoped, tag = 'scoped memory for fc_forward.1']
    %8 = vsyncpa [#allocation3], 0
    // Predicated region
    $region2: #{fc_forward.1} parent=1 // pred_check
      _
    $region3: #{fc_forward.1} parent=1 // pred_check_branch
      %10 = sbr.rel (0) target = $region5
    $region4: #{fc_forward.1} parent=1 // pred_region
      _
    $region5: #{fc_forward.1} parent=1 // pred_fallthru
      _
    // Predicated region
    $region6: #{fc_forward.1} parent=1 // pred_check
      _
    $region7: #{fc_forward.1} parent=1 // pred_check_branch
      %12 = sbr.rel (0) target = $region9
    $region8: #{fc_forward.1} parent=1 // pred_region
      %14 = vsyncadd [#allocation3], 0
      %s15 = sshll.u32 %s1, 4
      %s16 = int_to_ptr.hbm [resolvable:$true] %s15
      %s17 = sshll.u32 [#allocation2], 4
      %s18 = int_to_ptr.vmem [resolvable:$true] %s17
      %23 = dma.hbm_to_vmem [thread:$0]  %s16, 2048, %s18, [#allocation3], 128, 128, 8
    $region9: #{fc_forward.1} parent=1 // pred_fallthru
      _
    // Predicated region
    $region10: #{fc_forward.1} parent=1 // pred_check
      _
    $region11: #{fc_forward.1} parent=1 // pred_check_branch
      %25 = sbr.rel (0) target = $region13
    $region12: #{fc_forward.1} parent=1 // pred_region
      _
    $region13: #{fc_forward.1} parent=1 // pred_fallthru
      _
    // Predicated region
    $region14: #{fc_forward.1} parent=1 // pred_check
      _
    $region15: #{fc_forward.1} parent=1 // pred_check_branch
      %27 = sbr.rel (0) target = $region17
    $region16: #{fc_forward.1} parent=1 // pred_region
      %29 = dma.done [#allocation3], 2048
    $region17: #{fc_forward.1} parent=1 // pred_fallthru
      _
    %v30 = vld [vmem:[%s0] sm:$0xf]
    %v31 = vld [vmem:[%s0 + $0x4] sm:$0xf]
    %v32 = vld [vmem:[#allocation2] sm:$0xff]
    %v33 = vld [vmem:[#allocation2 + $0x8] sm:$0xff]
    %v34 = vld [vmem:[#allocation2 + $0x10] sm:$0xff]
    %v35 = vld [vmem:[#allocation2 + $0x18] sm:$0xff]
    %v36 = vld [vmem:[#allocation2 + $0x20] sm:$0xff]
    %v37 = vld [vmem:[#allocation2 + $0x28] sm:$0xff]
    %v38 = vld [vmem:[#allocation2 + $0x30] sm:$0xff]
    %v39 = vld [vmem:[#allocation2 + $0x38] sm:$0xff]
    %v40 = vld [vmem:[#allocation2 + $0x40] sm:$0xff]
    %v41 = vld [vmem:[#allocation2 + $0x48] sm:$0xff]
    %v42 = vld [vmem:[#allocation2 + $0x50] sm:$0xff]
    %v43 = vld [vmem:[#allocation2 + $0x58] sm:$0xff]
    %v44 = vld [vmem:[#allocation2 + $0x60] sm:$0xff]
    %v45 = vld [vmem:[#allocation2 + $0x68] sm:$0xff]
    %v46 = vld [vmem:[#allocation2 + $0x70] sm:$0xff]
    %v47 = vld [vmem:[#allocation2 + $0x78] sm:$0xff]
    %v48 = vld [vmem:[%s2] sm:$0x3]
    %v50 = vperm.slane %v48, 0
    %v51 = vperm.slane %v48, 1
    %v56 = vunpack.c.l.b16 %v30
    %v57 = vunpack.c.l.b16 %v31
    %v58 = vpack.c.b16 %v57, %v56
    %v76 = vunpack.c.l.b16 %v32
    %v77 = vunpack.c.h.b16 %v32
    %v78 = vunpack.c.l.b16 %v33
    %v79 = vunpack.c.h.b16 %v33
    %v80 = vunpack.c.l.b16 %v34
    %v81 = vunpack.c.h.b16 %v34
    %v82 = vunpack.c.l.b16 %v35
    %v83 = vunpack.c.h.b16 %v35
    %v84 = vunpack.c.l.b16 %v36
    %v85 = vunpack.c.h.b16 %v36
    %v86 = vunpack.c.l.b16 %v37
    %v87 = vunpack.c.h.b16 %v37
    %v88 = vunpack.c.l.b16 %v38
    %v89 = vunpack.c.h.b16 %v38
    %v90 = vunpack.c.l.b16 %v39
    %v91 = vunpack.c.h.b16 %v39
    %v92 = vunpack.c.l.b16 %v40
    %v93 = vunpack.c.h.b16 %v40
    %v94 = vunpack.c.l.b16 %v41
    %v95 = vunpack.c.h.b16 %v41
    %v96 = vunpack.c.l.b16 %v42
    %v97 = vunpack.c.h.b16 %v42
    %v98 = vunpack.c.l.b16 %v43
    %v99 = vunpack.c.h.b16 %v43
    %v100 = vunpack.c.l.b16 %v44
    %v101 = vunpack.c.h.b16 %v44
    %v102 = vunpack.c.l.b16 %v45
    %v103 = vunpack.c.h.b16 %v45
    %v104 = vunpack.c.l.b16 %v46
    %v105 = vunpack.c.h.b16 %v46
    %v106 = vunpack.c.l.b16 %v47
    %v107 = vunpack.c.h.b16 %v47
    %v108 = vpack.c.b16 %v78, %v76
    %v109 = vpack.c.b16 %v79, %v77
    %v110 = vpack.c.b16 %v82, %v80
    %v111 = vpack.c.b16 %v83, %v81
    %v112 = vpack.c.b16 %v86, %v84
    %v113 = vpack.c.b16 %v87, %v85
    %v114 = vpack.c.b16 %v90, %v88
    %v115 = vpack.c.b16 %v91, %v89
    %v116 = vpack.c.b16 %v94, %v92
    %v117 = vpack.c.b16 %v95, %v93
    %v118 = vpack.c.b16 %v98, %v96
    %v119 = vpack.c.b16 %v99, %v97
    %v120 = vpack.c.b16 %v102, %v100
    %v121 = vpack.c.b16 %v103, %v101
    %v122 = vpack.c.b16 %v106, %v104
    %v123 = vpack.c.b16 %v107, %v105
    %140 = vmatpush.bf16.msra.mxu0 %v122
    %141 = vmatpush.bf16.msra.mxu0 %v120
    %142 = vmatpush.bf16.msra.mxu0 %v118
    %143 = vmatpush.bf16.msra.mxu0 %v116
    %144 = vmatpush.bf16.msra.mxu0 %v114
    %145 = vmatpush.bf16.msra.mxu0 %v112
    %146 = vmatpush.bf16.msra.mxu0 %v110
    %147 = vmatpush.bf16.msra.mxu0 %v108
    %148 = vmatmul.bf16.gmra.mxu0 %v58
    %v149 = vpop.f32.mrf.mxu0
    %v150 = vadd.f32 %v50, %v149
    %v151 = vpop.f32.mrf.mxu0
    %v152 = vadd.f32 %v50, %v151
    %153 = vdwg.mxu0
    %154 = vmatpush.bf16.msra.mxu0 %v123
    %155 = vmatpush.bf16.msra.mxu0 %v121
    %156 = vmatpush.bf16.msra.mxu0 %v119
    %157 = vmatpush.bf16.msra.mxu0 %v117
    %158 = vmatpush.bf16.msra.mxu0 %v115
    %159 = vmatpush.bf16.msra.mxu0 %v113
    %160 = vmatpush.bf16.msra.mxu0 %v111
    %161 = vmatpush.bf16.msra.mxu0 %v109
    %162 = vmatmul.bf16.gmra.mxu0 %v58
    %v163 = vpop.f32.mrf.mxu0
    %v164 = vadd.f32 %v51, %v163
    %v165 = vpop.f32.mrf.mxu0
    %v166 = vadd.f32 %v51, %v165
    %167 = vdwg.mxu0
    %v168 = vmax.f32 %v150, 0.0
    %v169 = vmax.f32 %v164, 0.0
    %v170 = vmax.f32 %v152, 0.0
    %v171 = vmax.f32 %v166, 0.0
    %172 = vst [vmem:[%s3] sm:$0xff] %v168
    %173 = vst [vmem:[%s3 + $0x8] sm:$0xff] %v169
    %174 = vst [vmem:[%s3 + $0x10] sm:$0xff] %v170
    %175 = vst [vmem:[%s3 + $0x18] sm:$0xff] %v171
    // Predicated region
    $region18: #{fc_forward.1} parent=1 // pred_check
      _
    $region19: #{fc_forward.1} parent=1 // pred_check_branch
      %177 = sbr.rel (0) target = $region21
    $region20: #{fc_forward.1} parent=1 // pred_region
      _
    $region21: #{fc_forward.1} parent=1 // pred_fallthru
      _
    // Predicated region
    $region22: #{fc_forward.1} parent=1 // pred_check
      _
    $region23: #{fc_forward.1} parent=1 // pred_check_branch
      %179 = sbr.rel (0) target = $region25
    $region24: #{fc_forward.1} parent=1 // pred_region
      _
    $region25: #{fc_forward.1} parent=1 // pred_fallthru
      _
    %180 = vsyncpa [#allocation3], 1

</llo_original>
